<compile_context>
chip_gen: v7x
topology: tpu7x:2x2x1
jax: 0.10.0
libtpu: 0.0.40
codegen_flags: <defaults>
</compile_context>

<pallas_src>
import jax
import jax.numpy as jnp
from jax.experimental import pallas as pl
from jax.experimental.pallas import tpu as pltpu

NUM_LABELS = 7
HIDDEN = 64
ROWS = NUM_LABELS + 1              # 8 = [z[index] row] + 7 label rows
H_DIM = HIDDEN * ROWS              # 512


def _round_up(x, m):
    return ((x + m - 1) // m) * m


# ---------------------------------------------------------------------------
# Kernel 1: tiled message passing.
#   grid = (num_node_blocks,)  -- reduction axis, accumulates into acc_ref.
# ---------------------------------------------------------------------------
def _message_passing_kernel(idx_ref,      # SMEM (1,)   i32 : index (scalar prefetch)
                            adjrow_ref,   # VMEM (1,Nt) f32 : matrix[index] tile
                            denom_ref,    # VMEM (1,Nt) f32 : deg_k * deg[index] tile
                            lab8_ref,     # VMEM (8,Nt) f32 : [0 ; labels^T mask] tile
                            x_ref,        # VMEM (Nt,D) bf16: node feature tile
                            w_ref,        # VMEM (D,64) bf16: Linear weight (in,out)
                            b_ref,        # VMEM (1,64) f32 : Linear bias
                            h8_ref,       # VMEM (8,64) f32 : output (resident)
                            acc_ref):     # VMEM (8,64) f32 : scratch accumulator
    i = pl.program_id(0)
    nt = adjrow_ref.shape[1]
    f32 = jnp.float32

    @pl.when(i == 0)
    def _():
        acc_ref[...] = jnp.zeros_like(acc_ref)

    # z = x @ W + b  (bf16 inputs, f32 accumulation on the MXU)
    z = jnp.dot(x_ref[...], w_ref[...], preferred_element_type=f32) + b_ref[...]

    # para_k = 1/sqrt(deg_k * deg_index) for neighbors of `index`, else 0
    nbr = (adjrow_ref[...] != 0.0).astype(f32)                  # (1, Nt)
    denom = denom_ref[...]
    safe = jnp.where(denom > 0.0, denom, 1.0)
    para = nbr * jax.lax.rsqrt(safe)                            # (1, Nt), EUP rsqrt

    # selection matrix: row 0 = one_hot(index), rows 1..7 = label mask * para
    row = jax.lax.broadcasted_iota(jnp.int32, (ROWS, nt), 0)
    col = jax.lax.broadcasted_iota(jnp.int32, (ROWS, nt), 1) + i * nt
    onehot = jnp.logical_and(row == 0, col == idx_ref[0]).astype(f32)
    sel = onehot + lab8_ref[...] * para                         # (8, Nt)

    # one (8,Nt)@(Nt,64) MXU matmul fuses z[index] + 7 label-wise aggregations
    acc_ref[...] += jnp.dot(sel, z, preferred_element_type=f32)

    @pl.when(i == pl.num_programs(0) - 1)
    def _():
        h8_ref[...] = jnp.maximum(acc_ref[...], 0.0)            # relu, one store


# ---------------------------------------------------------------------------
# Kernel 2 (flag != 1): elementwise max-pool(x[index], h), then Linear(512,7)
# ---------------------------------------------------------------------------
def _predict_kernel(xidx_ref, h_ref, wpT_ref, bp_ref, out_ref):
    hp = jnp.maximum(xidx_ref[...], h_ref[...])                 # (1, 512) MaxPool1d(2)
    out_ref[...] = (jnp.dot(hp, wpT_ref[...],
                            preferred_element_type=jnp.float32) + bp_ref[...])


# ---------------------------------------------------------------------------
# Wrapper
# ---------------------------------------------------------------------------
def labelwise_passing(flag, index, matrix, x_features, x_labels, params,
                      *, block_n=512, compute_dtype=jnp.bfloat16):
    """Forward pass of `labelwisepassing` for a single node `index`."""
    n = matrix.shape[0]
    d = x_features.shape[1]
    if flag == 1:
        wT, b = params["w1T"], params["b1"]
    else:
        wT, b = params["w2T"], params["b2"]

    # ---- cheap per-graph / per-index glue (no O(N^2) kernel input) ----------
    deg = jnp.sum(matrix, axis=1).astype(jnp.float32)           # (N,) precompute once/graph
    adj_row = matrix[index].astype(jnp.float32)                 # (N,) = matrix[index]
    denom_row = deg * deg[index]                                # (N,) deg_k * deg[index]

    # node-axis tiling: lane-aligned blocks, padded columns contribute zero
    n128 = _round_up(n, 128)
    nt = min(block_n, n128)
    n_pad = _round_up(n, nt)
    pad = n_pad - n

    x_p = jnp.pad(x_features.astype(compute_dtype), ((0, pad), (0, 0)))
    wq = wT.astype(compute_dtype)
    b2d = b.reshape(1, HIDDEN).astype(jnp.float32)
    lab_mask = (x_labels != 0.0).astype(jnp.float32).T          # (7, N)
    lab8 = jnp.concatenate([jnp.zeros((1, n), jnp.float32), lab_mask], axis=0)
    lab8_p = jnp.pad(lab8, ((0, 0), (0, pad)))                  # (8, n_pad)
    adjrow_p = jnp.pad(adj_row, (0, pad)).reshape(1, n_pad)
    denom_p = jnp.pad(denom_row, (0, pad)).reshape(1, n_pad)
    idx_arr = jnp.asarray([index], dtype=jnp.int32)

    grid_spec = pltpu.PrefetchScalarGridSpec(
        num_scalar_prefetch=1,
        grid=(n_pad // nt,),
        in_specs=[
            pl.BlockSpec((1, nt), lambda i, idx: (0, i)),        # matrix[index] tile
            pl.BlockSpec((1, nt), lambda i, idx: (0, i)),        # deg*deg_idx tile
            pl.BlockSpec((ROWS, nt), lambda i, idx: (0, i)),     # label mask tile
            pl.BlockSpec((nt, d), lambda i, idx: (i, 0)),        # x tile
            pl.BlockSpec((d, HIDDEN), lambda i, idx: (0, 0)),    # W (resident)
            pl.BlockSpec((1, HIDDEN), lambda i, idx: (0, 0)),    # b (resident)
        ],
        out_specs=pl.BlockSpec((ROWS, HIDDEN), lambda i, idx: (0, 0)),
        scratch_shapes=[pltpu.VMEM((ROWS, HIDDEN), jnp.float32)],
    )
    h8 = pl.pallas_call(
        _message_passing_kernel,
        out_shape=jax.ShapeDtypeStruct((ROWS, HIDDEN), jnp.float32),
        grid_spec=grid_spec,
        compiler_params=pltpu.CompilerParams(
            dimension_semantics=("arbitrary",),        # node axis is a reduction
            vmem_limit_bytes=32 * 1024 * 1024),
    )(idx_arr, adjrow_p, denom_p, lab8_p, x_p, wq, b2d)

    # row-major flatten: [z[index] | tmp_a[0] | ... | tmp_a[6]] -> (1, 512)
    h = h8.reshape(1, H_DIM)
    if flag == 1:
        return h

    x_idx = x_features[index].reshape(1, H_DIM).astype(jnp.float32)
    out = pl.pallas_call(
        _predict_kernel,
        out_shape=jax.ShapeDtypeStruct((1, NUM_LABELS), jnp.float32),
        in_specs=[pl.BlockSpec(memory_space=pltpu.MemorySpace.VMEM)] * 4,
        out_specs=pl.BlockSpec(memory_space=pltpu.MemorySpace.VMEM),
    )(x_idx, h, params["wpT"], params["bp"].reshape(1, NUM_LABELS))
    return out  # (1, 7)


# ---------------------------------------------------------------------------
# Deterministic parameter init (same shapes as the torch module __init__)
# ---------------------------------------------------------------------------
def init_params(key, dim_in):
    ks = jax.random.split(key, 6)

    def lin(kw, kb, fan_in, fan_out):
        bound = 1.0 / jnp.sqrt(jnp.float32(fan_in))
        w = jax.random.uniform(kw, (fan_out, fan_in), jnp.float32, -bound, bound)
        bb = jax.random.uniform(kb, (fan_out,), jnp.float32, -bound, bound)
        return w, bb

    w1, b1 = lin(ks[0], ks[1], dim_in, HIDDEN)       # trans1
    w2, b2 = lin(ks[2], ks[3], H_DIM, HIDDEN)        # trans2
    wp, bp = lin(ks[4], ks[5], H_DIM, NUM_LABELS)    # predict
    return dict(w1T=w1.T, b1=b1, w2T=w2.T, b2=b2, wpT=wp.T, bp=bp)


# ---------------------------------------------------------------------------
# Pure-JAX reference (same math, same bf16 rounding of x/W) for a sanity check
# ---------------------------------------------------------------------------
def reference(flag, index, matrix, x, labels, params, compute_dtype=jnp.bfloat16):
    if flag == 1:
        wT, b = params["w1T"], params["b1"]
    else:
        wT, b = params["w2T"], params["b2"]
    xq = x.astype(compute_dtype).astype(jnp.float32)
    wq = wT.astype(compute_dtype).astype(jnp.float32)
    z = xq @ wq + b
    row = matrix[index]
    nbr = (row != 0.0).astype(jnp.float32)
    deg = matrix.sum(axis=1)
    deg_idx = row.sum()
    denom = deg * deg_idx
    safe = jnp.where(denom > 0.0, denom, 1.0)
    para = nbr / jnp.sqrt(safe)
    labm = (labels != 0.0).astype(jnp.float32)
    tmp_a = labm.T @ (para[:, None] * z)
    h = jnp.maximum(jnp.concatenate([z[index], tmp_a.reshape(-1)]), 0.0)[None, :]
    if flag == 1:
        return h
    hp = jnp.maximum(x[index][None, :], h)
    return hp @ params["wpT"] + params["bp"][None, :]


if __name__ == "__main__":
    key = jax.random.PRNGKey(0)
    N, dim_in, index = 256, 32, 3
    kp, ka, kl, kf1, kf2 = jax.random.split(key, 5)

    params = init_params(kp, dim_in)
    matrix = jax.random.bernoulli(ka, 0.3, (N, N)).astype(jnp.float32)
    matrix = matrix.at[index, (index + 1) % N].set(1.0)  # guarantee a neighbor
    x_labels = jax.random.bernoulli(kl, 0.5, (N, NUM_LABELS)).astype(jnp.float32)
    x_small = jax.random.normal(kf1, (N, dim_in), jnp.float32)  # flag == 1 path
    x_big = jax.random.normal(kf2, (N, H_DIM), jnp.float32)     # flag == 0 path

    # block_n=128 -> 2 node blocks: exercises the reduction grid + accumulator
    h1 = labelwise_passing(1, index, matrix, x_small, x_labels, params, block_n=128)
    out0 = labelwise_passing(0, index, matrix, x_big, x_labels, params, block_n=128)
    jax.block_until_ready((h1, out0))

    ref_h1 = reference(1, index, matrix, x_small, x_labels, params)
    ref_o0 = reference(0, index, matrix, x_big, x_labels, params)
    assert h1.shape == (1, H_DIM) and out0.shape == (1, NUM_LABELS)
    assert jnp.allclose(h1, ref_h1, rtol=1e-2, atol=1e-2), \
        float(jnp.max(jnp.abs(h1 - ref_h1)))
    assert jnp.allclose(out0, ref_o0, rtol=1e-2, atol=1e-2), \
        float(jnp.max(jnp.abs(out0 - ref_o0)))
    print("KERNEL_OK")
</pallas_src>

<mosaic_0001>
module attributes {stable_mosaic.version = 11 : i64} {
  func.func @_message_passing_kernel(%arg0: i32, %arg1: memref<1xi32, #tpu.memory_space<smem>>, %arg2: memref<1x128xf32, #tpu.memory_space<vmem>>, %arg3: memref<1x128xf32, #tpu.memory_space<vmem>>, %arg4: memref<8x128xf32, #tpu.memory_space<vmem>>, %arg5: memref<128x32xbf16, #tpu.memory_space<vmem>>, %arg6: memref<32x64xbf16, #tpu.memory_space<vmem>>, %arg7: memref<1x64xf32, #tpu.memory_space<vmem>>, %arg8: memref<8x64xf32, #tpu.memory_space<vmem>>, %arg9: memref<8x64xf32, #tpu.memory_space<vmem>>) attributes {dimension_semantics = [#tpu.dimension_semantics<arbitrary>], iteration_bounds = array<i64: 2>, scalar_prefetch = 1 : i64, scratch_operands = 1 : i64, tpu.core_type = #tpu.core_type<tc>, window_params = [{transform_indices = @transform_0, window_bounds = array<i64: 1, 128>}, {transform_indices = @transform_1, window_bounds = array<i64: 1, 128>}, {transform_indices = @transform_2, window_bounds = array<i64: 8, 128>}, {transform_indices = @transform_3, window_bounds = array<i64: 128, 32>}, {pipeline_mode = #tpu.pipeline_mode<synchronous>, transform_indices = @transform_4, window_bounds = array<i64: 32, 64>}, {pipeline_mode = #tpu.pipeline_mode<synchronous>, transform_indices = @transform_5, window_bounds = array<i64: 1, 64>}, {pipeline_mode = #tpu.pipeline_mode<synchronous>, transform_indices = @transform_6, window_bounds = array<i64: 8, 64>}]} {
    %c0_i32 = arith.constant 0 : i32
    %0 = arith.cmpi eq, %arg0, %c0_i32 : i32
    %1 = arith.extui %0 : i1 to i32
    %c0_i32_0 = arith.constant 0 : i32
    %2 = arith.cmpi ne, %1, %c0_i32_0 : i32
    scf.if %2 {
      %cst_23 = arith.constant 0.000000e+00 : f32
      %45 = vector.broadcast %cst_23 : f32 to vector<8x64xf32>
      %c0_24 = arith.constant 0 : index
      %c0_25 = arith.constant 0 : index
      %46 = vector.load %arg9[%c0_24, %c0_25] : memref<8x64xf32, #tpu.memory_space<vmem>>, vector<8x64xf32>
      tpu.vector_store %arg9[%c0_24, %c0_25], %45 {strides = array<i32>} : memref<8x64xf32, #tpu.memory_space<vmem>>, vector<8x64xf32>,
    } else {
    }
    %c0 = arith.constant 0 : index
    %c0_1 = arith.constant 0 : index
    %3 = vector.load %arg5[%c0, %c0_1] : memref<128x32xbf16, #tpu.memory_space<vmem>>, vector<128x32xbf16>
    %c0_2 = arith.constant 0 : index
    %c0_3 = arith.constant 0 : index
    %4 = vector.load %arg6[%c0_2, %c0_3] : memref<32x64xbf16, #tpu.memory_space<vmem>>, vector<32x64xbf16>
    %cst = arith.constant dense<0.000000e+00> : vector<128x64xf32>
    %5 = tpu.matmul %3, %4, %cst {dimension_numbers = #tpu.dot_dimension_numbers<[1], [0], [0], [1], [0, 0, 1, 1], [], []>} : vector<128x32xbf16>, vector<32x64xbf16>, vector<128x64xf32> -> vector<128x64xf32>
    %c0_4 = arith.constant 0 : index
    %c0_5 = arith.constant 0 : index
    %6 = vector.load %arg7[%c0_4, %c0_5] : memref<1x64xf32, #tpu.memory_space<vmem>>, vector<1x64xf32>
    %7 = vector.broadcast %6 : vector<1x64xf32> to vector<128x64xf32>
    %8 = arith.addf %5, %7 : vector<128x64xf32>
    %c0_6 = arith.constant 0 : index
    %c0_7 = arith.constant 0 : index
    %9 = vector.load %arg2[%c0_6, %c0_7] : memref<1x128xf32, #tpu.memory_space<vmem>>, vector<1x128xf32>
    %cst_8 = arith.constant 0.000000e+00 : f32
    %10 = vector.broadcast %cst_8 : f32 to vector<1x128xf32>
    %11 = arith.cmpf one, %9, %10 : vector<1x128xf32>
    %12 = arith.extui %11 : vector<1x128xi1> to vector<1x128xi32>
    %13 = arith.sitofp %12 : vector<1x128xi32> to vector<1x128xf32>
    %c0_9 = arith.constant 0 : index
    %c0_10 = arith.constant 0 : index
    %14 = vector.load %arg3[%c0_9, %c0_10] : memref<1x128xf32, #tpu.memory_space<vmem>>, vector<1x128xf32>
    %cst_11 = arith.constant 0.000000e+00 : f32
    %15 = vector.broadcast %cst_11 : f32 to vector<1x128xf32>
    %16 = arith.cmpf ogt, %14, %15 : vector<1x128xf32>
    %cst_12 = arith.constant 1.000000e+00 : f32
    %17 = vector.broadcast %cst_12 : f32 to vector<1x128xf32>
    %18 = arith.select %16, %14, %17 : vector<1x128xi1>, vector<1x128xf32>
    %19 = math.rsqrt %18 : vector<1x128xf32>
    %20 = arith.mulf %13, %19 : vector<1x128xf32>
    %21 = tpu.iota {dimensions = array<i32: 0>} : vector<8x128xi32>
    %22 = tpu.iota {dimensions = array<i32: 1>} : vector<8x128xi32>
    %c128_i32 = arith.constant 128 : i32
    %23 = arith.muli %arg0, %c128_i32 : i32
    %24 = vector.broadcast %23 : i32 to vector<8x128xi32>
    %25 = arith.addi %22, %24 : vector<8x128xi32>
    %c0_i32_13 = arith.constant 0 : i32
    %26 = vector.broadcast %c0_i32_13 : i32 to vector<8x128xi32>
    %27 = arith.cmpi eq, %21, %26 : vector<8x128xi32>
    %c0_14 = arith.constant 0 : index
    %28 = memref.load %arg1[%c0_14] : memref<1xi32, #tpu.memory_space<smem>>
    %29 = vector.broadcast %28 : i32 to vector<8x128xi32>
    %30 = arith.cmpi eq, %25, %29 : vector<8x128xi32>
    %31 = arith.andi %27, %30 : vector<8x128xi1>
    %32 = arith.extui %31 : vector<8x128xi1> to vector<8x128xi32>
    %33 = arith.sitofp %32 : vector<8x128xi32> to vector<8x128xf32>
    %c0_15 = arith.constant 0 : index
    %c0_16 = arith.constant 0 : index
    %34 = vector.load %arg4[%c0_15, %c0_16] : memref<8x128xf32, #tpu.memory_space<vmem>>, vector<8x128xf32>
    %35 = vector.broadcast %20 : vector<1x128xf32> to vector<8x128xf32>
    %36 = arith.mulf %34, %35 : vector<8x128xf32>
    %37 = arith.addf %33, %36 : vector<8x128xf32>
    %c0_17 = arith.constant 0 : index
    %c0_18 = arith.constant 0 : index
    %38 = vector.load %arg9[%c0_17, %c0_18] : memref<8x64xf32, #tpu.memory_space<vmem>>, vector<8x64xf32>
    %cst_19 = arith.constant dense<0.000000e+00> : vector<8x64xf32>
    %39 = tpu.matmul %37, %8, %cst_19 {dimension_numbers = #tpu.dot_dimension_numbers<[1], [0], [0], [1], [0, 0, 1, 1], [], []>} : vector<8x128xf32>, vector<128x64xf32>, vector<8x64xf32> -> vector<8x64xf32>
    %40 = arith.addf %38, %39 : vector<8x64xf32>
    %c0_20 = arith.constant 0 : index
    %c0_21 = arith.constant 0 : index
    %41 = vector.load %arg9[%c0_20, %c0_21] : memref<8x64xf32, #tpu.memory_space<vmem>>, vector<8x64xf32>
    tpu.vector_store %arg9[%c0_20, %c0_21], %40 {strides = array<i32>} : memref<8x64xf32, #tpu.memory_space<vmem>>, vector<8x64xf32>,
    %c1_i32 = arith.constant 1 : i32
    %42 = arith.cmpi eq, %arg0, %c1_i32 : i32
    %43 = arith.extui %42 : i1 to i32
    %c0_i32_22 = arith.constant 0 : i32
    %44 = arith.cmpi ne, %43, %c0_i32_22 : i32
    scf.if %44 {
      %c0_23 = arith.constant 0 : index
      %c0_24 = arith.constant 0 : index
      %45 = vector.load %arg9[%c0_23, %c0_24] : memref<8x64xf32, #tpu.memory_space<vmem>>, vector<8x64xf32>
      %cst_25 = arith.constant 0.000000e+00 : f32
      %46 = vector.broadcast %cst_25 : f32 to vector<8x64xf32>
      %47 = arith.maximumf %45, %46 : vector<8x64xf32>
      %c0_26 = arith.constant 0 : index
      %c0_27 = arith.constant 0 : index
      %48 = vector.load %arg8[%c0_26, %c0_27] : memref<8x64xf32, #tpu.memory_space<vmem>>, vector<8x64xf32>
      tpu.vector_store %arg8[%c0_26, %c0_27], %47 {strides = array<i32>} : memref<8x64xf32, #tpu.memory_space<vmem>>, vector<8x64xf32>,
    } else {
    }
    return
  }
  func.func @transform_0(%arg0: i32, %arg1: memref<1xi32, #tpu.memory_space<smem>>) -> (i32, i32) {
    %c0_i32 = arith.constant 0 : i32
    %c0_i32_0 = arith.constant 0 : i32
    return %c0_i32, %arg0 : i32, i32
  }
  func.func @transform_1(%arg0: i32, %arg1: memref<1xi32, #tpu.memory_space<smem>>) -> (i32, i32) {
    %c0_i32 = arith.constant 0 : i32
    %c0_i32_0 = arith.constant 0 : i32
    return %c0_i32, %arg0 : i32, i32
  }
  func.func @transform_2(%arg0: i32, %arg1: memref<1xi32, #tpu.memory_space<smem>>) -> (i32, i32) {
    %c0_i32 = arith.constant 0 : i32
    %c0_i32_0 = arith.constant 0 : i32
    return %c0_i32, %arg0 : i32, i32
  }
  func.func @transform_3(%arg0: i32, %arg1: memref<1xi32, #tpu.memory_space<smem>>) -> (i32, i32) {
    %c0_i32 = arith.constant 0 : i32
    %c0_i32_0 = arith.constant 0 : i32
    return %arg0, %c0_i32 : i32, i32
  }
  func.func @transform_4(%arg0: i32, %arg1: memref<1xi32, #tpu.memory_space<smem>>) -> (i32, i32) {
    %c0_i32 = arith.constant 0 : i32
    %c0_i32_0 = arith.constant 0 : i32
    %c0_i32_1 = arith.constant 0 : i32
    return %c0_i32, %c0_i32_0 : i32, i32
  }
  func.func @transform_5(%arg0: i32, %arg1: memref<1xi32, #tpu.memory_space<smem>>) -> (i32, i32) {
    %c0_i32 = arith.constant 0 : i32
    %c0_i32_0 = arith.constant 0 : i32
    %c0_i32_1 = arith.constant 0 : i32
    return %c0_i32, %c0_i32_0 : i32, i32
  }
  func.func @transform_6(%arg0: i32, %arg1: memref<1xi32, #tpu.memory_space<smem>>) -> (i32, i32) {
    %c0_i32 = arith.constant 0 : i32
    %c0_i32_0 = arith.constant 0 : i32
    %c0_i32_1 = arith.constant 0 : i32
    return %c0_i32, %c0_i32_0 : i32, i32
  }
}

</mosaic_0001>

<llo_original>
// kernel: tpu_custom_call.1
$region0: #{tpu_custom_call.1}
  #allocation0 [shape = 'u32[]', space=smem, size = 0x4, offset = 0x4, fixed_abs, tag = 'smem constant byte address 0x4 - core index']
  #allocation1 [shape = 'u32[144,128]{1,0:T(1,128)}', space=vmem, size = 0x12000, scoped, tag = 'internal scratch']
  #allocation2 [shape = 'f32[8,64]{1,0:T(8,128)}', space=vmem, size = 0x1000, scoped, tag = 'scratch operand']
  #allocation3 [shape = 's32[1]{0}', space=sflag, size = 0x4, scoped, tag = 'scoped memory for tpu_custom_call.1']
  #allocation4 [shape = 's32[1]{0:T(128)S(6)}', space=smem, size = 0x200, scoped, tag = 'prefetched SMEM operand 0']
  %s0 = inlined_call_operand.<no memory space> [shape: s32[1], index: 0, kind: input, shape index: {}]
  %s1 = inlined_call_operand.vmem [shape: f32[1,256], index: 1, kind: input, shape index: {}]
  %s2 = inlined_call_operand.vmem [shape: f32[1,256], index: 2, kind: input, shape index: {}]
  %s3 = inlined_call_operand.vmem [shape: f32[8,256], index: 3, kind: input, shape index: {}]
  %s4 = inlined_call_operand.vmem [shape: bf16[256,32], index: 4, kind: input, shape index: {}]
  %s5 = inlined_call_operand.vmem [shape: bf16[32,64], index: 5, kind: input, shape index: {}]
  %s6 = inlined_call_operand.vmem [shape: f32[1,64], index: 6, kind: input, shape index: {}]
  %s7 = inlined_call_operand.hbm [shape: f32[8,64], index: 7, kind: output, shape index: {}]
  %s8 = sld [smem:[#allocation0]]
  $region65: #{tpu_custom_call.1} parent=0
    _
  %s10 = ssub.s32 1, %s8
  %s11 = scalar_select 0, %s10, %s8
  %12 = sst [smem:[#allocation4]] %s0
  $region1: #{tpu_custom_call.1} parent=0
    #allocation5 [shape = 'u8[4096]{0}', space=vmem, size = 0x1000, scoped, tag = 'output window, operand 0, single buffered']
    #allocation6 [shape = 's32[2]{0}', space=sflag, size = 0x8, scoped, tag = 'scoped memory for tpu_custom_call.1']
    %13 = vsyncpa [#allocation6], 0
    loop: start=0, step=1, limit=4
    $region2: #{tpu_custom_call.1} parent=1 // loop_pre_header
      _
    $region3: #{tpu_custom_call.1} parent=1 // loop_header
      %s15 = sphi 0, %s19
      %p16 = scmp.ge.s32.totalorder %s15, 4
      %s25 = sphi 0, %s27
      %s28 = sphi 0, %s25
      %s29 = sphi 0, %s28
      %s45 = sphi 0, %s29
      %s51 = sphi 0, %s53
      %s54 = sphi 0, %s51
      %s55 = sphi 0, %s54
      %s71 = sphi 0, %s55
      %s77 = sphi 0, %s79
      %s80 = sphi 0, %s77
      %s81 = sphi 0, %s80
      %s97 = sphi 0, %s81
      %s103 = sphi 0, %s105
      %s106 = sphi 0, %s103
      %s107 = sphi 0, %s106
      %s123 = sphi 0, %s107
      %s127 = sphi 0, %s127
      %s129 = sphi 0, %s127
      %s130 = sphi 0, %s129
      %s144 = sphi 0, %s130
      %s148 = sphi 0, %s148
      %s150 = sphi 0, %s148
      %s151 = sphi 0, %s150
      %s165 = sphi 0, %s151
      %s169 = sphi 0, %s169
      %s171 = sphi 0, %s169
      %s172 = sphi 0, %s171
      %s186 = sphi 0, %s172
    $region4: #{tpu_custom_call.1} parent=1 // loop_header_branch
      %18 = sbr.rel (%p16) target = $region8
    $region5: #{tpu_custom_call.1} parent=1 // loop_body
      %s20 = ssub.s32 %s15, 1
      %s21 = ssub.s32 %s15, 2
      %s22 = sadd.s32 %s15, 1
      %s23 = ssub.s32 %s15, %s22
      %p24 = scmp.eq.s32.totalorder %s23, 0
      %s26 = sadd.s32 %s25, 1
      %s27 = scalar_select %p24, %s25, %s26
      %p30 = pneg %p24
      %p31 = scmp.eq.s32.totalorder %s15, 1
      %p32 = por %p30, %p31
      %p33 = scmp.ne.s32.totalorder %s25, %s28
      %p34 = scmp.eq.s32.totalorder %s15, 0
      %p35 = por %p33, %p34
      %p36 = scmp.ne.s32.totalorder %s25, %s28
      %p37 = scmp.eq.s32.totalorder %s20, 1
      %p38 = por %p36, %p37
      %p39 = scmp.ne.s32.totalorder %s28, %s29
      %p40 = scmp.eq.s32.totalorder %s20, 0
      %p41 = por %p39, %p40
      %p42 = scmp.ne.s32.totalorder %s28, %s29
      %p43 = scmp.eq.s32.totalorder %s21, 1
      %p44 = por %p42, %p43
      %p46 = scmp.ne.s32.totalorder %s29, %s45
      %p47 = scmp.eq.s32.totalorder %s21, 0
      %p48 = por %p46, %p47
      %s49 = ssub.s32 %s15, %s22
      %p50 = scmp.eq.s32.totalorder %s49, 0
      %s52 = sadd.s32 %s51, 1
      %s53 = scalar_select %p50, %s51, %s52
      %p56 = pneg %p50
      %p57 = scmp.eq.s32.totalorder %s15, 1
      %p58 = por %p56, %p57
      %p59 = scmp.ne.s32.totalorder %s51, %s54
      %p60 = scmp.eq.s32.totalorder %s15, 0
      %p61 = por %p59, %p60
      %p62 = scmp.ne.s32.totalorder %s51, %s54
      %p63 = scmp.eq.s32.totalorder %s20, 1
      %p64 = por %p62, %p63
      %p65 = scmp.ne.s32.totalorder %s54, %s55
      %p66 = scmp.eq.s32.totalorder %s20, 0
      %p67 = por %p65, %p66
      %p68 = scmp.ne.s32.totalorder %s54, %s55
      %p69 = scmp.eq.s32.totalorder %s21, 1
      %p70 = por %p68, %p69
      %p72 = scmp.ne.s32.totalorder %s55, %s71
      %p73 = scmp.eq.s32.totalorder %s21, 0
      %p74 = por %p72, %p73
      %s75 = ssub.s32 %s15, %s22
      %p76 = scmp.eq.s32.totalorder %s75, 0
      %s78 = sadd.s32 %s77, 1
      %s79 = scalar_select %p76, %s77, %s78
      %p82 = pneg %p76
      %p83 = scmp.eq.s32.totalorder %s15, 1
      %p84 = por %p82, %p83
      %p85 = scmp.ne.s32.totalorder %s77, %s80
      %p86 = scmp.eq.s32.totalorder %s15, 0
      %p87 = por %p85, %p86
      %p88 = scmp.ne.s32.totalorder %s77, %s80
      %p89 = scmp.eq.s32.totalorder %s20, 1
      %p90 = por %p88, %p89
      %p91 = scmp.ne.s32.totalorder %s80, %s81
      %p92 = scmp.eq.s32.totalorder %s20, 0
      %p93 = por %p91, %p92
      %p94 = scmp.ne.s32.totalorder %s80, %s81
      %p95 = scmp.eq.s32.totalorder %s21, 1
      %p96 = por %p94, %p95
      %p98 = scmp.ne.s32.totalorder %s81, %s97
      %p99 = scmp.eq.s32.totalorder %s21, 0
      %p100 = por %p98, %p99
      %s101 = ssub.s32 %s15, %s22
      %p102 = scmp.eq.s32.totalorder %s101, 0
      %s104 = sadd.s32 %s103, 1
      %s105 = scalar_select %p102, %s103, %s104
      %p108 = pneg %p102
      %p109 = scmp.eq.s32.totalorder %s15, 1
      %p110 = por %p108, %p109
      %p111 = scmp.ne.s32.totalorder %s103, %s106
      %p112 = scmp.eq.s32.totalorder %s15, 0
      %p113 = por %p111, %p112
      %p114 = scmp.ne.s32.totalorder %s103, %s106
      %p115 = scmp.eq.s32.totalorder %s20, 1
      %p116 = por %p114, %p115
      %p117 = scmp.ne.s32.totalorder %s106, %s107
      %p118 = scmp.eq.s32.totalorder %s20, 0
      %p119 = por %p117, %p118
      %p120 = scmp.ne.s32.totalorder %s106, %s107
      %p121 = scmp.eq.s32.totalorder %s21, 1
      %p122 = por %p120, %p121
      %p124 = scmp.ne.s32.totalorder %s107, %s123
      %p125 = scmp.eq.s32.totalorder %s21, 0
      %p126 = por %p124, %p125
      %s128 = sadd.s32 %s127, 1
      %p131 = scmp.eq.s32.totalorder %s15, 1
      %p132 = scmp.ne.s32.totalorder %s127, %s129
      %p133 = scmp.eq.s32.totalorder %s15, 0
      %p134 = por %p132, %p133
      %p135 = scmp.ne.s32.totalorder %s127, %s129
      %p136 = scmp.eq.s32.totalorder %s20, 1
      %p137 = por %p135, %p136
      %p138 = scmp.ne.s32.totalorder %s129, %s130
      %p139 = scmp.eq.s32.totalorder %s20, 0
      %p140 = por %p138, %p139
      %p141 = scmp.ne.s32.totalorder %s129, %s130
      %p142 = scmp.eq.s32.totalorder %s21, 1
      %p143 = por %p141, %p142
      %p145 = scmp.ne.s32.totalorder %s130, %s144
      %p146 = scmp.eq.s32.totalorder %s21, 0
      %p147 = por %p145, %p146
      %s149 = sadd.s32 %s148, 1
      %p152 = scmp.eq.s32.totalorder %s15, 1
      %p153 = scmp.ne.s32.totalorder %s148, %s150
      %p154 = scmp.eq.s32.totalorder %s15, 0
      %p155 = por %p153, %p154
      %p156 = scmp.ne.s32.totalorder %s148, %s150
      %p157 = scmp.eq.s32.totalorder %s20, 1
      %p158 = por %p156, %p157
      %p159 = scmp.ne.s32.totalorder %s150, %s151
      %p160 = scmp.eq.s32.totalorder %s20, 0
      %p161 = por %p159, %p160
      %p162 = scmp.ne.s32.totalorder %s150, %s151
      %p163 = scmp.eq.s32.totalorder %s21, 1
      %p164 = por %p162, %p163
      %p166 = scmp.ne.s32.totalorder %s151, %s165
      %p167 = scmp.eq.s32.totalorder %s21, 0
      %p168 = por %p166, %p167
      %s170 = sadd.s32 %s169, 1
      %p173 = scmp.eq.s32.totalorder %s15, 1
      %p174 = scmp.ne.s32.totalorder %s169, %s171
      %p175 = scmp.eq.s32.totalorder %s15, 0
      %p176 = por %p174, %p175
      %p177 = scmp.ne.s32.totalorder %s169, %s171
      %p178 = scmp.eq.s32.totalorder %s20, 1
      %p179 = por %p177, %p178
      %p180 = scmp.ne.s32.totalorder %s171, %s172
      %p181 = scmp.eq.s32.totalorder %s20, 0
      %p182 = por %p180, %p181
      %p183 = scmp.ne.s32.totalorder %s171, %s172
      %p184 = scmp.eq.s32.totalorder %s21, 1
      %p185 = por %p183, %p184
      %p187 = scmp.ne.s32.totalorder %s172, %s186
      %p188 = scmp.eq.s32.totalorder %s21, 0
      %p189 = por %p187, %p188
      %p190 = scmp.le.s32.totalorder 1, %s15
      %p191 = scmp.lt.s32.totalorder %s15, 3
      %p192 = pnand %p190, %p191
      %p193 = pneg %p192
      // Predicated region
      $region9: #{tpu_custom_call.1} parent=5 // pred_check
        _
      $region10: #{tpu_custom_call.1} parent=5 // pred_check_branch
        %195 = sbr.rel (%p192) target = $region12
      $region11: #{tpu_custom_call.1} parent=5 // pred_region
        %s196 = ssub.s32 %s15, 1
        // Predicated region
        $region13: #{tpu_custom_call.1} parent=11 // pred_check
          %p197 = pneg %p140
        $region14: #{tpu_custom_call.1} parent=11 // pred_check_branch
          %199 = sbr.rel (%p197) target = $region16
        $region15: #{tpu_custom_call.1} parent=11 // pred_region
          _
        $region16: #{tpu_custom_call.1} parent=11 // pred_fallthru
          _
        // Predicated region
        $region17: #{tpu_custom_call.1} parent=11 // pred_check
          %p200 = pneg %p161
        $region18: #{tpu_custom_call.1} parent=11 // pred_check_branch
          %202 = sbr.rel (%p200) target = $region20
        $region19: #{tpu_custom_call.1} parent=11 // pred_region
          _
        $region20: #{tpu_custom_call.1} parent=11 // pred_fallthru
          _
      $region12: #{tpu_custom_call.1} parent=5 // pred_fallthru
        _
      %p203 = scmp.lt.s32.totalorder %s15, 2
      // Predicated region
      $region21: #{tpu_custom_call.1} parent=5 // pred_check
        %p204 = pneg %p203
      $region22: #{tpu_custom_call.1} parent=5 // pred_check_branch
        %206 = sbr.rel (%p204) target = $region24
      $region23: #{tpu_custom_call.1} parent=5 // pred_region
        // Predicated region
        $region25: #{tpu_custom_call.1} parent=23 // pred_check
          %p207 = pneg %p35
        $region26: #{tpu_custom_call.1} parent=23 // pred_check_branch
          %209 = sbr.rel (%p207) target = $region28
        $region27: #{tpu_custom_call.1} parent=23 // pred_region
          %p210 = scmp.lt.s32.totalorder %s15, 1
          %s211 = scalar_select %p210, %s15, 1
          %s212 = scalar_lea.vmem %s1, %s211
        $region28: #{tpu_custom_call.1} parent=23 // pred_fallthru
          _
        // Predicated region
        $region29: #{tpu_custom_call.1} parent=23 // pred_check
          %p213 = pneg %p61
        $region30: #{tpu_custom_call.1} parent=23 // pred_check_branch
          %215 = sbr.rel (%p213) target = $region32
        $region31: #{tpu_custom_call.1} parent=23 // pred_region
          %p216 = scmp.lt.s32.totalorder %s15, 1
          %s217 = scalar_select %p216, %s15, 1
          %s218 = scalar_lea.vmem %s2, %s217
        $region32: #{tpu_custom_call.1} parent=23 // pred_fallthru
          _
        // Predicated region
        $region33: #{tpu_custom_call.1} parent=23 // pred_check
          %p219 = pneg %p87
        $region34: #{tpu_custom_call.1} parent=23 // pred_check_branch
          %221 = sbr.rel (%p219) target = $region36
        $region35: #{tpu_custom_call.1} parent=23 // pred_region
          %p222 = scmp.lt.s32.totalorder %s15, 1
          %s223 = scalar_select %p222, %s15, 1
          %s224 = smul.addr %s223, 8
          %s225 = scalar_lea.vmem %s3, %s224
        $region36: #{tpu_custom_call.1} parent=23 // pred_fallthru
          _
        // Predicated region
        $region37: #{tpu_custom_call.1} parent=23 // pred_check
          %p226 = pneg %p113
        $region38: #{tpu_custom_call.1} parent=23 // pred_check_branch
          %228 = sbr.rel (%p226) target = $region40
        $region39: #{tpu_custom_call.1} parent=23 // pred_region
          %s229 = smul.u32 16, %s15
          %p230 = scmp.lt.s32.totalorder %s229, 31
          %s231 = scalar_select %p230, %s229, 31
          %s232 = smul.addr %s231, 4
          %s233 = scalar_lea.vmem %s4, %s232
          %s234 = smul.u32 16, %s15
        $region40: #{tpu_custom_call.1} parent=23 // pred_fallthru
          _
      $region24: #{tpu_custom_call.1} parent=5 // pred_fallthru
        _
      %p235 = scmp.le.s32.totalorder 1, %s15
      %p236 = scmp.lt.s32.totalorder %s15, 3
      %p237 = pnand %p235, %p236
      %p238 = pneg %p237
      // Predicated region
      $region41: #{tpu_custom_call.1} parent=5 // pred_check
        _
      $region42: #{tpu_custom_call.1} parent=5 // pred_check_branch
        %240 = sbr.rel (%p237) target = $region44
      $region43: #{tpu_custom_call.1} parent=5 // pred_region
        %s241 = ssub.s32 %s15, 1
        %p242 = scmp.lt.s32.totalorder %s20, 1
        %s243 = scalar_select %p242, %s20, 1
        %s244 = scalar_lea.vmem %s1, %s243
        %p245 = pneg %p41
        %p246 = pneg %p38
        %p247 = scmp.lt.s32.totalorder %s20, 1
        %s248 = scalar_select %p247, %s20, 1
        %s249 = scalar_lea.vmem %s2, %s248
        %p250 = pneg %p67
        %p251 = pneg %p64
        %p252 = scmp.lt.s32.totalorder %s20, 1
        %s253 = scalar_select %p252, %s20, 1
        %s254 = smul.addr %s253, 8
        %s255 = scalar_lea.vmem %s3, %s254
        %p256 = pneg %p93
        %p257 = pneg %p90
        %s258 = smul.u32 16, %s20
        %p259 = scmp.lt.s32.totalorder %s258, 31
        %s260 = scalar_select %p259, %s258, 31
        %s261 = smul.addr %s260, 4
        %s262 = scalar_lea.vmem %s4, %s261
        %p263 = pneg %p119
        %p264 = pneg %p116
        %p265 = pneg %p140
        %p266 = pneg %p137
        %p267 = pneg %p161
        %p268 = pneg %p158
        %p269 = pneg %p182
        %p270 = pneg %p179
        %p271 = scmp.lt.s32.totalorder %s20, 1
        %s272 = scalar_select %p271, %s20, 1
        %s273 = scalar_lea.vmem %s1, %s272
        %p274 = scmp.lt.s32.totalorder %s20, 1
        %s275 = scalar_select %p274, %s20, 1
        %s276 = scalar_lea.vmem %s2, %s275
        %p277 = scmp.lt.s32.totalorder %s20, 1
        %s278 = scalar_select %p277, %s20, 1
        %s279 = smul.addr %s278, 8
        %s280 = scalar_lea.vmem %s3, %s279
        %s281 = smul.u32 16, %s20
        %p282 = scmp.lt.s32.totalorder %s281, 31
        %s283 = scalar_select %p282, %s281, 31
        %s284 = smul.addr %s283, 4
        %s285 = scalar_lea.vmem %s4, %s284
        %s286 = smul.u32 16, %s20
        %p288 = scmp.eq.s32.totalorder %s20, 0
        // Predicated region
        $region45: #{tpu_custom_call.1} parent=43 // pred_check
          %p289 = pneg %p288
        $region46: #{tpu_custom_call.1} parent=43 // pred_check_branch
          %291 = sbr.rel (%p289) target = $region48
        $region47: #{tpu_custom_call.1} parent=43 // pred_region
          %vm292 = vcmask 523264
          %293 = vst.msk [vmem:[#allocation2] sm:$0xff] %vm292, 0.0
        $region48: #{tpu_custom_call.1} parent=43 // pred_fallthru
          _
        %v294 = vld [vmem:[%s285] sm:$0xf]
        %v295 = vld [vmem:[%s285 + $0x4] sm:$0xf]
        %v296 = vld [vmem:[%s285 + $0x8] sm:$0xf]
        %v297 = vld [vmem:[%s285 + $0xc] sm:$0xf]
        %v298 = vld [vmem:[%s285 + $0x10] sm:$0xf]
        %v299 = vld [vmem:[%s285 + $0x14] sm:$0xf]
        %v300 = vld [vmem:[%s285 + $0x18] sm:$0xf]
        %v301 = vld [vmem:[%s285 + $0x1c] sm:$0xf]
        %v302 = vld [vmem:[%s285 + $0x20] sm:$0xf]
        %v303 = vld [vmem:[%s285 + $0x24] sm:$0xf]
        %v304 = vld [vmem:[%s285 + $0x28] sm:$0xf]
        %v305 = vld [vmem:[%s285 + $0x2c] sm:$0xf]
        %v306 = vld [vmem:[%s285 + $0x30] sm:$0xf]
        %v307 = vld [vmem:[%s285 + $0x34] sm:$0xf]
        %v308 = vld [vmem:[%s285 + $0x38] sm:$0xf]
        %v309 = vld [vmem:[%s285 + $0x3c] sm:$0xf]
        %v310 = vld [vmem:[%s5] sm:$0xf]
        %v311 = vld [vmem:[%s5 + $0x4] sm:$0xf]
        %v312 = vld [vmem:[%s5 + $0x8] sm:$0xf]
        %v313 = vld [vmem:[%s5 + $0xc] sm:$0xf]
        %v314 = vld [vmem:[%s6] sm:$0x1]
        %v316 = vlaneseq
        %v317 = vshrl.u32 %v316, 7
        %v318 = vsub.s32 0, %v317
        %v319 = vrot.slane %v314, %v318
        %v337 = vunpack.c.l.b16 %v294
        %v338 = vunpack.c.l.b16 %v295
        %v339 = vunpack.c.l.b16 %v296
        %v340 = vunpack.c.l.b16 %v297
        %v341 = vunpack.c.l.b16 %v298
        %v342 = vunpack.c.l.b16 %v299
        %v343 = vunpack.c.l.b16 %v300
        %v344 = vunpack.c.l.b16 %v301
        %v345 = vunpack.c.l.b16 %v302
        %v346 = vunpack.c.l.b16 %v303
        %v347 = vunpack.c.l.b16 %v304
        %v348 = vunpack.c.l.b16 %v305
        %v349 = vunpack.c.l.b16 %v306
        %v350 = vunpack.c.l.b16 %v307
        %v351 = vunpack.c.l.b16 %v308
        %v352 = vunpack.c.l.b16 %v309
        %v353 = vpack.c.b16 %v338, %v337
        %v354 = vpack.c.b16 %v340, %v339
        %v355 = vpack.c.b16 %v342, %v341
        %v356 = vpack.c.b16 %v344, %v343
        %v357 = vpack.c.b16 %v346, %v345
        %v358 = vpack.c.b16 %v348, %v347
        %v359 = vpack.c.b16 %v350, %v349
        %v360 = vpack.c.b16 %v352, %v351
        %v365 = vunpack.c.l.b16 %v310
        %v366 = vunpack.c.l.b16 %v311
        %v367 = vunpack.c.l.b16 %v312
        %v368 = vunpack.c.l.b16 %v313
        %v369 = vpack.c.b16 %v366, %v365
        %v370 = vpack.c.b16 %v368, %v367
        %vm373 = vcmask 261120
        %v375 = vsel %vm373, %v353, 0
        %v378 = vsel %vm373, %v354, 0
        %v381 = vsel %vm373, %v355, 0
        %v384 = vsel %vm373, %v356, 0
        %v387 = vsel %vm373, %v357, 0
        %v390 = vsel %vm373, %v358, 0
        %v393 = vsel %vm373, %v359, 0
        %v396 = vsel %vm373, %v360, 0
        %398 = vmatprep.subr.bf16.mxu0 0
        %399 = vmatpush1.bf16.msra.mxu0 %v369
        %400 = vmatprep.subr.bf16.mxu0 0
        %401 = vmatpush1.bf16.msra.mxu0 %v370
        %402 = vmatprep.subr.bf16.mxu0 0
        %403 = vmatpush1.bf16.msra.mxu0 0
        %404 = vmatprep.subr.bf16.mxu0 0
        %405 = vmatpush1.bf16.msra.mxu0 0
        %406 = vmatprep.subr.bf16.mxu0 0
        %407 = vmatpush1.bf16.msra.mxu0 0
        %408 = vmatprep.subr.bf16.mxu0 0
        %409 = vmatpush1.bf16.msra.mxu0 0
        %410 = vmatprep.subr.bf16.mxu0 0
        %411 = vmatpush1.bf16.msra.mxu0 0
        %412 = vmatprep.subr.bf16.mxu0 0
        %413 = vmatpush1.bf16.msra.mxu0 0
        %414 = vmatprep.subr.bf16.mxu0 0
        %415 = vmatpush1.bf16.msra.mxu0 0
        %416 = vmatprep.subr.bf16.mxu0 0
        %417 = vmatpush1.bf16.msra.mxu0 0
        %418 = vmatprep.subr.bf16.mxu0 0
        %419 = vmatpush1.bf16.msra.mxu0 0
        %420 = vmatprep.subr.bf16.mxu0 0
        %421 = vmatpush1.bf16.msra.mxu0 0
        %422 = vmatprep.subr.bf16.mxu0 0
        %423 = vmatpush1.bf16.msra.mxu0 0
        %424 = vmatprep.subr.bf16.mxu0 0
        %425 = vmatpush1.bf16.msra.mxu0 0
        %426 = vmatprep.subr.bf16.mxu0 0
        %427 = vmatpush1.bf16.msra.mxu0 0
        %428 = vmatprep.subr.bf16.mxu0 0
        %429 = vmatpush1.bf16.msra.mxu0 0
        %430 = vmatprep.mubr.bf16.mxu0 0
        %431 = vmatmul.mubr.bf16.gmra.mrb[0].mxu0 %v375
        %v432 = vpop.f32.mrb[0].mxu0
        %v433 = vadd.f32 %v319, %v432
        %v434 = vpop.f32.mrb[0].mxu0
        %v435 = vpop.f32.mrb[0].mxu0
        %v436 = vadd.f32 %v319, %v435
        %v437 = vpop.f32.mrb[0].mxu0
        %438 = vmatprep.mubr.bf16.mxu0 0
        %439 = vmatmul.mubr.bf16.gmra.mrb[0].mxu0 %v378
        %v440 = vpop.f32.mrb[0].mxu0
        %v441 = vadd.f32 %v319, %v440
        %v442 = vpop.f32.mrb[0].mxu0
        %v443 = vpop.f32.mrb[0].mxu0
        %v444 = vadd.f32 %v319, %v443
        %v445 = vpop.f32.mrb[0].mxu0
        %446 = vmatprep.mubr.bf16.mxu0 0
        %447 = vmatmul.mubr.bf16.gmra.mrb[0].mxu0 %v381
        %v448 = vpop.f32.mrb[0].mxu0
        %v449 = vadd.f32 %v319, %v448
        %v450 = vpop.f32.mrb[0].mxu0
        %v451 = vpop.f32.mrb[0].mxu0
        %v452 = vadd.f32 %v319, %v451
        %v453 = vpop.f32.mrb[0].mxu0
        %454 = vmatprep.mubr.bf16.mxu0 0
        %455 = vmatmul.mubr.bf16.gmra.mrb[0].mxu0 %v384
        %v456 = vpop.f32.mrb[0].mxu0
        %v457 = vadd.f32 %v319, %v456
        %v458 = vpop.f32.mrb[0].mxu0
        %v459 = vpop.f32.mrb[0].mxu0
        %v460 = vadd.f32 %v319, %v459
        %v461 = vpop.f32.mrb[0].mxu0
        %462 = vmatprep.mubr.bf16.mxu0 0
        %463 = vmatmul.mubr.bf16.gmra.mrb[0].mxu0 %v387
        %v464 = vpop.f32.mrb[0].mxu0
        %v465 = vadd.f32 %v319, %v464
        %v466 = vpop.f32.mrb[0].mxu0
        %v467 = vpop.f32.mrb[0].mxu0
        %v468 = vadd.f32 %v319, %v467
        %v469 = vpop.f32.mrb[0].mxu0
        %470 = vmatprep.mubr.bf16.mxu0 0
        %471 = vmatmul.mubr.bf16.gmra.mrb[0].mxu0 %v390
        %v472 = vpop.f32.mrb[0].mxu0
        %v473 = vadd.f32 %v319, %v472
        %v474 = vpop.f32.mrb[0].mxu0
        %v475 = vpop.f32.mrb[0].mxu0
        %v476 = vadd.f32 %v319, %v475
        %v477 = vpop.f32.mrb[0].mxu0
        %478 = vmatprep.mubr.bf16.mxu0 0
        %479 = vmatmul.mubr.bf16.gmra.mrb[0].mxu0 %v393
        %v480 = vpop.f32.mrb[0].mxu0
        %v481 = vadd.f32 %v319, %v480
        %v482 = vpop.f32.mrb[0].mxu0
        %v483 = vpop.f32.mrb[0].mxu0
        %v484 = vadd.f32 %v319, %v483
        %v485 = vpop.f32.mrb[0].mxu0
        %486 = vmatprep.mubr.bf16.mxu0 0
        %487 = vmatmul.mubr.bf16.gmra.mrb[0].mxu0 %v396
        %v488 = vpop.f32.mrb[0].mxu0
        %v489 = vadd.f32 %v319, %v488
        %v490 = vpop.f32.mrb[0].mxu0
        %v491 = vpop.f32.mrb[0].mxu0
        %v492 = vadd.f32 %v319, %v491
        %v493 = vpop.f32.mrb[0].mxu0
        %494 = vdwg.mxu0
        %v495 = vld [vmem:[%s273] sm:$0x1]
        %vm496 = vcmp.ne.f32.partialorder %v495, 0.0
        %v497 = vsel %vm496, 1, 0
        %v498 = vcvt.s32.f32 %v497
        %v499 = vld [vmem:[%s276] sm:$0x1]
        %vm500 = vcmp.gt.f32.partialorder %v499, 0.0
        %v501 = vsel %vm500, %v499, 1.0
        %v502 = vrsqrt.pop %v501
        %v503 = vmul.f32 %v498, %v502
        %v504 = vlaneseq
        %v505 = vshrl.u32 %v504, 7
        %v506 = vlaneseq
        %v507 = vand.u32 %v506, 127
        %s508 = smul.u32 %s20, 128
        %v509 = vstv %s508
        %v510 = vadd.s32 %v507, %v509
        %vm511 = vcmp.eq.s32.totalorder %v505, 0
        %s512 = sld [smem:[#allocation4]]
        %v513 = vstv %s512
        %vm514 = vcmp.eq.s32.totalorder %v510, %v513
        %vm515 = vmand %vm511, %vm514
        %v516 = vsel %vm515, 1, 0
        %v517 = vcvt.s32.f32 %v516
        %v518 = vld [vmem:[%s280] sm:$0xff]
        %v520 = vlaneseq
        %v521 = vshrl.u32 %v520, 7
        %v522 = vsub.s32 0, %v521
        %v523 = vrot.slane %v503, %v522
        %v525 = vmul.f32 %v518, %v523
        %v526 = vadd.f32 %v517, %v525
        %v527 = vld [vmem:[#allocation2] sm:$0xff]
        %528 = vmatprep.subr.mxu0 0.0
        %529 = vmatpush1.msra.mxu0 %v433
        %530 = vmatprep.subr.mxu0 0.0
        %531 = vmatpush1.msra.mxu0 %v436
        %532 = vmatprep.subr.mxu0 0.0
        %533 = vmatpush1.msra.mxu0 %v441
        %534 = vmatprep.subr.mxu0 0.0
        %535 = vmatpush1.msra.mxu0 %v444
        %536 = vmatprep.subr.mxu0 0.0
        %537 = vmatpush1.msra.mxu0 %v449
        %538 = vmatprep.subr.mxu0 0.0
        %539 = vmatpush1.msra.mxu0 %v452
        %540 = vmatprep.subr.mxu0 0.0
        %541 = vmatpush1.msra.mxu0 %v457
        %542 = vmatprep.subr.mxu0 0.0
        %543 = vmatpush1.msra.mxu0 %v460
        %544 = vmatprep.subr.mxu0 0.0
        %545 = vmatpush1.msra.mxu0 %v465
        %546 = vmatprep.subr.mxu0 0.0
        %547 = vmatpush1.msra.mxu0 %v468
        %548 = vmatprep.subr.mxu0 0.0
        %549 = vmatpush1.msra.mxu0 %v473
        %550 = vmatprep.subr.mxu0 0.0
        %551 = vmatpush1.msra.mxu0 %v476
        %552 = vmatprep.subr.mxu0 0.0
        %553 = vmatpush1.msra.mxu0 %v481
        %554 = vmatprep.subr.mxu0 0.0
        %555 = vmatpush1.msra.mxu0 %v484
        %556 = vmatprep.subr.mxu0 0.0
        %557 = vmatpush1.msra.mxu0 %v489
        %558 = vmatprep.subr.mxu0 0.0
        %559 = vmatpush1.msra.mxu0 %v492
        %560 = vmatprep.subr.mxu0 0.0
        %561 = vmatpush1.msra.mxu0 0.0
        %562 = vmatprep.subr.mxu0 0.0
        %563 = vmatpush1.msra.mxu0 0.0
        %564 = vmatprep.subr.mxu0 0.0
        %565 = vmatpush1.msra.mxu0 0.0
        %566 = vmatprep.subr.mxu0 0.0
        %567 = vmatpush1.msra.mxu0 0.0
        %568 = vmatprep.subr.mxu0 0.0
        %569 = vmatpush1.msra.mxu0 0.0
        %570 = vmatprep.subr.mxu0 0.0
        %571 = vmatpush1.msra.mxu0 0.0
        %572 = vmatprep.subr.mxu0 0.0
        %573 = vmatpush1.msra.mxu0 0.0
        %574 = vmatprep.subr.mxu0 0.0
        %575 = vmatpush1.msra.mxu0 0.0
        %576 = vmatprep.subr.mxu0 0.0
        %577 = vmatpush1.msra.mxu0 0.0
        %578 = vmatprep.subr.mxu0 0.0
        %579 = vmatpush1.msra.mxu0 0.0
        %580 = vmatprep.subr.mxu0 0.0
        %581 = vmatpush1.msra.mxu0 0.0
        %582 = vmatprep.subr.mxu0 0.0
        %583 = vmatpush1.msra.mxu0 0.0
        %584 = vmatprep.subr.mxu0 0.0
        %585 = vmatpush1.msra.mxu0 0.0
        %586 = vmatprep.subr.mxu0 0.0
        %587 = vmatpush1.msra.mxu0 0.0
        %588 = vmatprep.subr.mxu0 0.0
        %589 = vmatpush1.msra.mxu0 0.0
        %590 = vmatprep.subr.mxu0 0.0
        %591 = vmatpush1.msra.mxu0 0.0
        %592 = vmatprep.mubr.f32.mxu0 0.0
        %593 = vmatmul.mubr.f32.gmra.mrb[0].mxu0 %v526
        %v594 = vpop.f32.mrb[0].mxu0
        %v595 = vadd.f32 0.0, %v594
        %v596 = vpop.f32.mrb[0].mxu0
        %597 = vdwg.mxu0
        %v598 = vadd.f32 %v527, %v595
        %vm599 = vcmask 523264
        %600 = vst.msk [vmem:[#allocation2] sm:$0xff] %vm599, %v598
        %p601 = scmp.eq.s32.totalorder %s20, 1
        // Predicated region
        $region49: #{tpu_custom_call.1} parent=43 // pred_check
          %p602 = pneg %p601
        $region50: #{tpu_custom_call.1} parent=43 // pred_check_branch
          %604 = sbr.rel (%p602) target = $region52
        $region51: #{tpu_custom_call.1} parent=43 // pred_region
          %v605 = vld [vmem:[#allocation2] sm:$0xff]
          %v606 = vmax.f32 %v605, 0.0
          %607 = vst.msk [vmem:[#allocation5] sm:$0xff] %vm599, %v606
        $region52: #{tpu_custom_call.1} parent=43 // pred_fallthru
          _
        // Predicated region
        $region53: #{tpu_custom_call.1} parent=43 // pred_check
          %p608 = pneg %p179
        $region54: #{tpu_custom_call.1} parent=43 // pred_check_branch
          %610 = sbr.rel (%p608) target = $region56
        $region55: #{tpu_custom_call.1} parent=43 // pred_region
          %s612 = ssub.s32 128, 128
          %613 = vsyncadd [#allocation6], %s612
          %s615 = sshll.u32 [#allocation5], 4
          %s616 = int_to_ptr.vmem [resolvable:$true] %s615
          %618 = dma.vmem_to_hbm [thread:$0]  %s616, 128, %s7, [#allocation6]
        $region56: #{tpu_custom_call.1} parent=43 // pred_fallthru
          _
        // Predicated region
        $region57: #{tpu_custom_call.1} parent=43 // pred_check
          %p619 = pneg %p179
        $region58: #{tpu_custom_call.1} parent=43 // pred_check_branch
          %621 = sbr.rel (%p619) target = $region60
        $region59: #{tpu_custom_call.1} parent=43 // pred_region
          %622 = dma.done [#allocation6], 128
        $region60: #{tpu_custom_call.1} parent=43 // pred_fallthru
          _
      $region44: #{tpu_custom_call.1} parent=5 // pred_fallthru
        _
      %p623 = scmp.le.s32.totalorder 2, %s15
      // Predicated region
      $region61: #{tpu_custom_call.1} parent=5 // pred_check
        %p624 = pneg %p623
      $region62: #{tpu_custom_call.1} parent=5 // pred_check_branch
        %626 = sbr.rel (%p624) target = $region64
      $region63: #{tpu_custom_call.1} parent=5 // pred_region
        %s627 = ssub.s32 %s15, 2
      $region64: #{tpu_custom_call.1} parent=5 // pred_fallthru
        _
    $region6: #{tpu_custom_call.1} parent=1 // loop_footer
      %s19 = sadd.s32 1, %s15
    $region7: #{tpu_custom_call.1} parent=1 // loop_footer_branch
      %14 = sbr.rel target = $region3
    $region8: #{tpu_custom_call.1} parent=1 // loop_exit
      _
    %628 = vsyncpa [#allocation6], 1
    %s629 = scalar_lea.sflag [#allocation6], 1
    %630 = vsyncpa %s629, 1

</llo_original>
